<compile_context>
chip_gen: v7x
topology: tpu7x:2x2x1
jax: 0.10.0
libtpu: 0.0.40
codegen_flags: <defaults>
</compile_context>

<pallas_src>
import jax
import jax.numpy as jnp
from jax import lax
import numpy as np
from jax.experimental import pallas as pl
from jax.experimental.pallas import tpu as pltpu

_STATS_LANES = 128  # lane-dense slab holding [kl_v, kl_ca, cross_kl, probmatch]


def _pnba_core_kernel(ca_m_ref, ca_lv_ref, v_m_ref, v_lv_ref,
                      eps_post_ref, eps_ca_ref, eps_v_ref,
                      a_ref, b_ref,
                      plds_ref, ca_samp_ref, v_samp_ref, stats_ref,
                      kl_v_acc, kl_ca_acc, ckl_acc, dist_acc):
    k = pl.program_id(0)
    nk = pl.num_programs(0)

    @pl.when(k == 0)
    def _init():
        kl_v_acc[...] = jnp.zeros_like(kl_v_acc)
        kl_ca_acc[...] = jnp.zeros_like(kl_ca_acc)
        ckl_acc[...] = jnp.zeros_like(ckl_acc)
        dist_acc[...] = jnp.zeros_like(dist_acc)

    ca_m, ca_lv = ca_m_ref[...], ca_lv_ref[...]
    v_m, v_lv = v_m_ref[...], v_lv_ref[...]
    B = ca_m.shape[0]

    # ---- transcendental dedup ------------------------------------------------
    e_ca = jnp.exp(ca_lv)                      # exp(ca_log_var)
    e_v = jnp.exp(v_lv)                        # exp(video_log_var)
    s = e_ca + e_v
    r_s = pl.reciprocal(s, approx=True)        # 1 / (e_ca + e_v)
    r_ca = pl.reciprocal(e_ca, approx=True)    # 1 / exp(ca_log_var)
    r_v = pl.reciprocal(e_v, approx=True)      # 1 / exp(video_log_var)
    log_s = jnp.log(s)

    # posterior fusion (e_ca/(e_ca+e_v) form: same math as the sigmoid gates,
    # numerically more stable and exp-free given e_ca/e_v above)
    post_m = (ca_m * e_v + v_m * e_ca) * r_s
    e_post = e_ca * e_v * r_s                  # exp(post_log_var)

    # ---- reparameterized samples (exp(0.5*lv) == sqrt(exp(lv))) --------------
    plds_ref[...] = post_m + jnp.sqrt(e_post) * eps_post_ref[...]
    ca_samp_ref[...] = ca_m + jnp.sqrt(e_ca) * eps_ca_ref[...]
    v_samp_ref[...] = v_m + jnp.sqrt(e_v) * eps_v_ref[...]

    # ---- KL partial sums (accumulated over the D grid axis) ------------------
    # 1 + post_lv - ca_lv == 1 + v_lv - log_s ;  1 + post_lv - v_lv == 1 + ca_lv - log_s
    d_pc = post_m - ca_m
    d_pv = post_m - v_m
    d_vc = v_m - ca_m
    d_vc2 = d_vc * d_vc
    c1 = 1.0 + v_lv - log_s - (d_pc * d_pc + e_post) * r_ca   # KL(post || ca)
    c2 = 1.0 + ca_lv - log_s - (d_pv * d_pv + e_post) * r_v   # KL(post || video)
    c3 = 2.0 - (d_vc2 + e_v) * r_ca - (d_vc2 + e_ca) * r_v    # symmetric KL
    kl_v_acc[...] += jnp.sum(c1, axis=-1, keepdims=True)
    kl_ca_acc[...] += jnp.sum(c2, axis=-1, keepdims=True)
    ckl_acc[...] += jnp.sum(c3, axis=-1, keepdims=True)

    # ---- probmatch distance accumulation (VPU path, B is tiny) ---------------
    # dist[i, j] += sum_d ( (v_m[i,d]-ca_m[j,d])^2 + e_ca[j,d] ) + sum_d e_v[i,d]
    # TODO(synk): for large B, switch to a padded Gram (MXU) formulation.
    sig_v = jnp.sum(e_v, axis=-1, keepdims=True)               # (B, 1)
    col = lax.broadcasted_iota(jnp.int32, (B, B), 1)
    part = jnp.zeros((B, B), jnp.float32)
    for j in range(B):                                         # B static & small
        col_j = jnp.sum((v_m - ca_m[j:j + 1, :]) ** 2 + e_ca[j:j + 1, :],
                        axis=-1, keepdims=True)                # (B, 1)
        part = part + jnp.where(col == j, col_j, 0.0)
    dist_acc[...] += part + sig_v

    # ---- finalize: BCE probmatch + coalesced lane-dense stats output ---------
    @pl.when(k == nk - 1)
    def _finalize():
        a = a_ref[0]
        b = b_ref[0]
        logits = b - a * dist_acc[...]
        labels = (lax.broadcasted_iota(jnp.int32, (B, B), 0) ==
                  lax.broadcasted_iota(jnp.int32, (B, B), 1)).astype(jnp.float32)
        # binary_cross_entropy_with_logits, reduction='sum'
        bce = (jnp.maximum(logits, 0.0) - logits * labels +
               jnp.log(1.0 + jnp.exp(-jnp.abs(logits))))
        pm = jnp.sum(bce)

        kl_v = -0.5 * kl_v_acc[...]
        kl_ca = -0.5 * kl_ca_acc[...]
        ckl = -0.5 * ckl_acc[...]
        lane = lax.broadcasted_iota(jnp.int32, stats_ref.shape, 1)
        stats_ref[...] = (jnp.where(lane == 0, kl_v, 0.0) +
                          jnp.where(lane == 1, kl_ca, 0.0) +
                          jnp.where(lane == 2, ckl, 0.0) +
                          jnp.where(lane == 3, pm, 0.0))


def _choose_tile_d(D, B, vmem_budget_bytes=8 << 20):
    """Largest multiple-of-128 divisor of D whose double-buffered footprint
    (7 inputs + 3 outputs, f32) fits the budget — conservative for v7x VMEM."""
    cap = max(128, vmem_budget_bytes // (2 * 10 * 4 * max(B, 1)))
    cap -= cap % 128
    if D <= cap:
        return D
    t = cap
    while t >= 128:
        if D % t == 0:
            return t
        t -= 128
    return D


def pnba_probabilistic_core(ca_mean, ca_log_var, video_mean, video_log_var,
                            eps_post, eps_ca, eps_video, a, b, *, tile_d=None):
    """Runs the PNBA probabilistic bottleneck in one Pallas call.

    Inputs are (B, c, n, T) float32 arrays (mean / log-variance of the ca and
    video embeddings) plus reparameterization noise of the same shape and the
    scalar affine parameters a, b.
    """
    B, c, n, T = ca_mean.shape
    D = c * n * T
    if tile_d is None:
        tile_d = _choose_tile_d(D, B)
    if D % tile_d != 0:
        tile_d = D
    nk = D // tile_d

    flat = lambda x: jnp.asarray(x, jnp.float32).reshape(B, D)
    args = [flat(ca_mean), flat(ca_log_var), flat(video_mean), flat(video_log_var),
            flat(eps_post), flat(eps_ca), flat(eps_video),
            jnp.asarray([a], jnp.float32), jnp.asarray([b], jnp.float32)]

    tile_spec = pl.BlockSpec((B, tile_d), lambda k: (0, k))
    smem = pl.BlockSpec(memory_space=pltpu.MemorySpace.SMEM)

    out_shape = (
        jax.ShapeDtypeStruct((B, D), jnp.float32),             # plds
        jax.ShapeDtypeStruct((B, D), jnp.float32),             # ca_sample
        jax.ShapeDtypeStruct((B, D), jnp.float32),             # video_sample
        jax.ShapeDtypeStruct((B, _STATS_LANES), jnp.float32),  # packed losses
    )
    out_specs = (tile_spec, tile_spec, tile_spec,
                 pl.BlockSpec((B, _STATS_LANES), lambda k: (0, 0)))

    grid_spec = pltpu.PrefetchScalarGridSpec(
        num_scalar_prefetch=0,
        grid=(nk,),
        in_specs=[tile_spec] * 7 + [smem, smem],
        out_specs=out_specs,
        scratch_shapes=[pltpu.VMEM((B, 1), jnp.float32),   # kl_v accumulator
                        pltpu.VMEM((B, 1), jnp.float32),   # kl_ca accumulator
                        pltpu.VMEM((B, 1), jnp.float32),   # cross-kl accumulator
                        pltpu.VMEM((B, B), jnp.float32)],  # probmatch distance
    )

    # TODO(synk): on v7x a second ("parallel") grid axis over D-chunks with
    # per-chunk partial stats reduced in the wrapper would use the 2nd TC.
    plds, ca_s, v_s, stats = pl.pallas_call(
        _pnba_core_kernel,
        out_shape=out_shape,
        grid_spec=grid_spec,
        compiler_params=pltpu.CompilerParams(
            dimension_semantics=("arbitrary",)),
    )(*args)

    shape4 = (B, c, n, T)
    return (plds.reshape(shape4), ca_s.reshape(shape4), v_s.reshape(shape4),
            stats[:, 0], stats[:, 1], stats[:, 2], stats[0, 3])


# ----------------------------- pure-JAX reference ---------------------------
def _reference(ca_mean, ca_log_var, video_mean, video_log_var,
               eps_post, eps_ca, eps_video, a, b):
    B = ca_mean.shape[0]
    f = lambda x: x.reshape(B, -1)
    ca_m, ca_lv = f(ca_mean), f(ca_log_var)
    v_m, v_lv = f(video_mean), f(video_log_var)
    post_m = (ca_m / (1 + jnp.exp(ca_lv - v_lv)) + v_m / (1 + jnp.exp(v_lv - ca_lv)))
    post_lv = v_lv + ca_lv - jnp.log(jnp.exp(v_lv) + jnp.exp(ca_lv))

    def mix_kl(pm, plv, mm, mlv):
        return -0.5 * jnp.sum(
            1 + plv - mlv - ((pm - mm) ** 2 + jnp.exp(plv)) / jnp.exp(mlv), axis=-1)

    kl_v = mix_kl(post_m, post_lv, ca_m, ca_lv)
    kl_ca = mix_kl(post_m, post_lv, v_m, v_lv)
    ckl = mix_kl(v_m, v_lv, ca_m, ca_lv) + mix_kl(ca_m, ca_lv, v_m, v_lv)

    mu_dist = jnp.sum((v_m[:, None, :] - ca_m[None, :, :]) ** 2, axis=-1)
    sigma_dist = (jnp.sum(jnp.exp(v_lv), -1)[:, None] +
                  jnp.sum(jnp.exp(ca_lv), -1)[None, :])
    logits = -a * (mu_dist + sigma_dist) + b
    labels = jnp.eye(B, dtype=jnp.float32)
    bce = (jnp.maximum(logits, 0.0) - logits * labels +
           jnp.log1p(jnp.exp(-jnp.abs(logits))))
    pm_loss = jnp.sum(bce)

    plds = post_m + jnp.exp(0.5 * post_lv) * f(eps_post)
    ca_s = ca_m + jnp.exp(0.5 * ca_lv) * f(eps_ca)
    v_s = v_m + jnp.exp(0.5 * v_lv) * f(eps_video)
    s4 = ca_mean.shape
    return (plds.reshape(s4), ca_s.reshape(s4), v_s.reshape(s4),
            kl_v, kl_ca, ckl, pm_loss)


if __name__ == "__main__":
    # Small shapes consistent with the module: B=2 mice/batches, z_channels c=4,
    # n=8 latent "neurons", T=8 time steps.  D = c*n*T = 256.
    B, c, n, T = 2, 4, 8, 8
    key = jax.random.PRNGKey(0)
    ks = jax.random.split(key, 7)
    shape = (B, c, n, T)

    ca_mean = 0.5 * jax.random.normal(ks[0], shape, jnp.float32)
    ca_log_var = 0.1 * jax.random.normal(ks[1], shape, jnp.float32)
    video_mean = 0.5 * jax.random.normal(ks[2], shape, jnp.float32)
    video_log_var = 0.1 * jax.random.normal(ks[3], shape, jnp.float32)
    # torch.randn_like draws replaced by deterministic noise fed to the kernel.
    eps_post = jax.random.normal(ks[4], shape, jnp.float32)
    eps_ca = jax.random.normal(ks[5], shape, jnp.float32)
    eps_video = jax.random.normal(ks[6], shape, jnp.float32)
    a, b = 1.0, 0.0  # nn.Parameter initial values in PNBA.__init__

    # tile_d=128 -> 2 grid steps, exercising the accumulate/finalize pipeline.
    outs = pnba_probabilistic_core(ca_mean, ca_log_var, video_mean, video_log_var,
                                   eps_post, eps_ca, eps_video, a, b, tile_d=128)
    outs = jax.block_until_ready(outs)

    refs = _reference(ca_mean, ca_log_var, video_mean, video_log_var,
                      eps_post, eps_ca, eps_video, a, b)
    for o, r in zip(outs, refs):
        np.testing.assert_allclose(np.asarray(o), np.asarray(r),
                                   rtol=2e-3, atol=5e-2)

    # TODO(synk): restore_video / restored_ca heads require the undefined
    # Ca_Decoder / invLDProjector / VideoDecoder sub-modules and are omitted.
    print("KERNEL_OK")
</pallas_src>

<mosaic_0001>
module attributes {stable_mosaic.version = 11 : i64} {
  func.func @_pnba_core_kernel(%arg0: i32, %arg1: memref<2x128xf32, #tpu.memory_space<vmem>>, %arg2: memref<2x128xf32, #tpu.memory_space<vmem>>, %arg3: memref<2x128xf32, #tpu.memory_space<vmem>>, %arg4: memref<2x128xf32, #tpu.memory_space<vmem>>, %arg5: memref<2x128xf32, #tpu.memory_space<vmem>>, %arg6: memref<2x128xf32, #tpu.memory_space<vmem>>, %arg7: memref<2x128xf32, #tpu.memory_space<vmem>>, %arg8: memref<1xf32, #tpu.memory_space<smem>>, %arg9: memref<1xf32, #tpu.memory_space<smem>>, %arg10: memref<2x128xf32, #tpu.memory_space<vmem>>, %arg11: memref<2x128xf32, #tpu.memory_space<vmem>>, %arg12: memref<2x128xf32, #tpu.memory_space<vmem>>, %arg13: memref<2x128xf32, #tpu.memory_space<vmem>>, %arg14: memref<2x1xf32, #tpu.memory_space<vmem>>, %arg15: memref<2x1xf32, #tpu.memory_space<vmem>>, %arg16: memref<2x1xf32, #tpu.memory_space<vmem>>, %arg17: memref<2x2xf32, #tpu.memory_space<vmem>>) attributes {dimension_semantics = [#tpu.dimension_semantics<arbitrary>], iteration_bounds = array<i64: 2>, scalar_prefetch = 0 : i64, scratch_operands = 4 : i64, tpu.core_type = #tpu.core_type<tc>, window_params = [{transform_indices = @transform_0, window_bounds = array<i64: 2, 128>}, {transform_indices = @transform_1, window_bounds = array<i64: 2, 128>}, {transform_indices = @transform_2, window_bounds = array<i64: 2, 128>}, {transform_indices = @transform_3, window_bounds = array<i64: 2, 128>}, {transform_indices = @transform_4, window_bounds = array<i64: 2, 128>}, {transform_indices = @transform_5, window_bounds = array<i64: 2, 128>}, {transform_indices = @transform_6, window_bounds = array<i64: 2, 128>}, {transform_indices = @transform_7, window_bounds = array<i64: 1>}, {transform_indices = @transform_8, window_bounds = array<i64: 1>}, {transform_indices = @transform_9, window_bounds = array<i64: 2, 128>}, {transform_indices = @transform_10, window_bounds = array<i64: 2, 128>}, {transform_indices = @transform_11, window_bounds = array<i64: 2, 128>}, {pipeline_mode = #tpu.pipeline_mode<synchronous>, transform_indices = @transform_12, window_bounds = array<i64: 2, 128>}]} {
    %c0_i32 = arith.constant 0 : i32
    %0 = arith.cmpi eq, %arg0, %c0_i32 : i32
    %1 = arith.extui %0 : i1 to i32
    %c0_i32_0 = arith.constant 0 : i32
    %2 = arith.cmpi ne, %1, %c0_i32_0 : i32
    scf.if %2 {
      %cst_50 = arith.constant 0.000000e+00 : f32
      %119 = vector.broadcast %cst_50 : f32 to vector<2x1xf32>
      %c0_51 = arith.constant 0 : index
      %c0_52 = arith.constant 0 : index
      %120 = vector.load %arg14[%c0_51, %c0_52] : memref<2x1xf32, #tpu.memory_space<vmem>>, vector<2x1xf32>
      tpu.vector_store %arg14[%c0_51, %c0_52], %119 {strides = array<i32>} : memref<2x1xf32, #tpu.memory_space<vmem>>, vector<2x1xf32>,
      %cst_53 = arith.constant 0.000000e+00 : f32
      %121 = vector.broadcast %cst_53 : f32 to vector<2x1xf32>
      %c0_54 = arith.constant 0 : index
      %c0_55 = arith.constant 0 : index
      %122 = vector.load %arg15[%c0_54, %c0_55] : memref<2x1xf32, #tpu.memory_space<vmem>>, vector<2x1xf32>
      tpu.vector_store %arg15[%c0_54, %c0_55], %121 {strides = array<i32>} : memref<2x1xf32, #tpu.memory_space<vmem>>, vector<2x1xf32>,
      %cst_56 = arith.constant 0.000000e+00 : f32
      %123 = vector.broadcast %cst_56 : f32 to vector<2x1xf32>
      %c0_57 = arith.constant 0 : index
      %c0_58 = arith.constant 0 : index
      %124 = vector.load %arg16[%c0_57, %c0_58] : memref<2x1xf32, #tpu.memory_space<vmem>>, vector<2x1xf32>
      tpu.vector_store %arg16[%c0_57, %c0_58], %123 {strides = array<i32>} : memref<2x1xf32, #tpu.memory_space<vmem>>, vector<2x1xf32>,
      %cst_59 = arith.constant 0.000000e+00 : f32
      %125 = vector.broadcast %cst_59 : f32 to vector<2x2xf32>
      %c0_60 = arith.constant 0 : index
      %c0_61 = arith.constant 0 : index
      %126 = vector.load %arg17[%c0_60, %c0_61] : memref<2x2xf32, #tpu.memory_space<vmem>>, vector<2x2xf32>
      tpu.vector_store %arg17[%c0_60, %c0_61], %125 {strides = array<i32>} : memref<2x2xf32, #tpu.memory_space<vmem>>, vector<2x2xf32>,
    } else {
    }
    %c0 = arith.constant 0 : index
    %c0_1 = arith.constant 0 : index
    %3 = vector.load %arg1[%c0, %c0_1] : memref<2x128xf32, #tpu.memory_space<vmem>>, vector<2x128xf32>
    %c0_2 = arith.constant 0 : index
    %c0_3 = arith.constant 0 : index
    %4 = vector.load %arg2[%c0_2, %c0_3] : memref<2x128xf32, #tpu.memory_space<vmem>>, vector<2x128xf32>
    %c0_4 = arith.constant 0 : index
    %c0_5 = arith.constant 0 : index
    %5 = vector.load %arg3[%c0_4, %c0_5] : memref<2x128xf32, #tpu.memory_space<vmem>>, vector<2x128xf32>
    %c0_6 = arith.constant 0 : index
    %c0_7 = arith.constant 0 : index
    %6 = vector.load %arg4[%c0_6, %c0_7] : memref<2x128xf32, #tpu.memory_space<vmem>>, vector<2x128xf32>
    %7 = math.exp %4 : vector<2x128xf32>
    %8 = math.exp %6 : vector<2x128xf32>
    %9 = arith.addf %7, %8 : vector<2x128xf32>
    %10 = tpu.reciprocal %9 {approx = true} : vector<2x128xf32> -> vector<2x128xf32>
    %11 = tpu.reciprocal %7 {approx = true} : vector<2x128xf32> -> vector<2x128xf32>
    %12 = tpu.reciprocal %8 {approx = true} : vector<2x128xf32> -> vector<2x128xf32>
    %13 = math.log %9 : vector<2x128xf32>
    %14 = arith.mulf %3, %8 : vector<2x128xf32>
    %15 = arith.mulf %5, %7 : vector<2x128xf32>
    %16 = arith.addf %14, %15 : vector<2x128xf32>
    %17 = arith.mulf %16, %10 : vector<2x128xf32>
    %18 = arith.mulf %7, %8 : vector<2x128xf32>
    %19 = arith.mulf %18, %10 : vector<2x128xf32>
    %20 = math.sqrt %19 : vector<2x128xf32>
    %c0_8 = arith.constant 0 : index
    %c0_9 = arith.constant 0 : index
    %21 = vector.load %arg5[%c0_8, %c0_9] : memref<2x128xf32, #tpu.memory_space<vmem>>, vector<2x128xf32>
    %22 = arith.mulf %20, %21 : vector<2x128xf32>
    %23 = arith.addf %17, %22 : vector<2x128xf32>
    %c0_10 = arith.constant 0 : index
    %c0_11 = arith.constant 0 : index
    %24 = vector.load %arg10[%c0_10, %c0_11] : memref<2x128xf32, #tpu.memory_space<vmem>>, vector<2x128xf32>
    tpu.vector_store %arg10[%c0_10, %c0_11], %23 {strides = array<i32>} : memref<2x128xf32, #tpu.memory_space<vmem>>, vector<2x128xf32>,
    %25 = math.sqrt %7 : vector<2x128xf32>
    %c0_12 = arith.constant 0 : index
    %c0_13 = arith.constant 0 : index
    %26 = vector.load %arg6[%c0_12, %c0_13] : memref<2x128xf32, #tpu.memory_space<vmem>>, vector<2x128xf32>
    %27 = arith.mulf %25, %26 : vector<2x128xf32>
    %28 = arith.addf %3, %27 : vector<2x128xf32>
    %c0_14 = arith.constant 0 : index
    %c0_15 = arith.constant 0 : index
    %29 = vector.load %arg11[%c0_14, %c0_15] : memref<2x128xf32, #tpu.memory_space<vmem>>, vector<2x128xf32>
    tpu.vector_store %arg11[%c0_14, %c0_15], %28 {strides = array<i32>} : memref<2x128xf32, #tpu.memory_space<vmem>>, vector<2x128xf32>,
    %30 = math.sqrt %8 : vector<2x128xf32>
    %c0_16 = arith.constant 0 : index
    %c0_17 = arith.constant 0 : index
    %31 = vector.load %arg7[%c0_16, %c0_17] : memref<2x128xf32, #tpu.memory_space<vmem>>, vector<2x128xf32>
    %32 = arith.mulf %30, %31 : vector<2x128xf32>
    %33 = arith.addf %5, %32 : vector<2x128xf32>
    %c0_18 = arith.constant 0 : index
    %c0_19 = arith.constant 0 : index
    %34 = vector.load %arg12[%c0_18, %c0_19] : memref<2x128xf32, #tpu.memory_space<vmem>>, vector<2x128xf32>
    tpu.vector_store %arg12[%c0_18, %c0_19], %33 {strides = array<i32>} : memref<2x128xf32, #tpu.memory_space<vmem>>, vector<2x128xf32>,
    %35 = arith.subf %17, %3 : vector<2x128xf32>
    %36 = arith.subf %17, %5 : vector<2x128xf32>
    %37 = arith.subf %5, %3 : vector<2x128xf32>
    %38 = arith.mulf %37, %37 : vector<2x128xf32>
    %cst = arith.constant 1.000000e+00 : f32
    %39 = vector.broadcast %cst : f32 to vector<2x128xf32>
    %40 = arith.addf %39, %6 : vector<2x128xf32>
    %41 = arith.subf %40, %13 : vector<2x128xf32>
    %42 = arith.mulf %35, %35 : vector<2x128xf32>
    %43 = arith.addf %42, %19 : vector<2x128xf32>
    %44 = arith.mulf %43, %11 : vector<2x128xf32>
    %45 = arith.subf %41, %44 : vector<2x128xf32>
    %cst_20 = arith.constant 1.000000e+00 : f32
    %46 = vector.broadcast %cst_20 : f32 to vector<2x128xf32>
    %47 = arith.addf %46, %4 : vector<2x128xf32>
    %48 = arith.subf %47, %13 : vector<2x128xf32>
    %49 = arith.mulf %36, %36 : vector<2x128xf32>
    %50 = arith.addf %49, %19 : vector<2x128xf32>
    %51 = arith.mulf %50, %12 : vector<2x128xf32>
    %52 = arith.subf %48, %51 : vector<2x128xf32>
    %53 = arith.addf %38, %8 : vector<2x128xf32>
    %54 = arith.mulf %53, %11 : vector<2x128xf32>
    %cst_21 = arith.constant 2.000000e+00 : f32
    %55 = vector.broadcast %cst_21 : f32 to vector<2x128xf32>
    %56 = arith.subf %55, %54 : vector<2x128xf32>
    %57 = arith.addf %38, %7 : vector<2x128xf32>
    %58 = arith.mulf %57, %12 : vector<2x128xf32>
    %59 = arith.subf %56, %58 : vector<2x128xf32>
    %c0_22 = arith.constant 0 : index
    %c0_23 = arith.constant 0 : index
    %60 = vector.load %arg14[%c0_22, %c0_23] : memref<2x1xf32, #tpu.memory_space<vmem>>, vector<2x1xf32>
    %cst_24 = arith.constant dense<0.000000e+00> : vector<2xf32>
    %61 = vector.multi_reduction <add>, %45, %cst_24 [1] : vector<2x128xf32> to vector<2xf32>
    %62 = vector.shape_cast %61 : vector<2xf32> to vector<2x1xf32>
    %63 = arith.addf %60, %62 : vector<2x1xf32>
    %c0_25 = arith.constant 0 : index
    %c0_26 = arith.constant 0 : index
    %64 = vector.load %arg14[%c0_25, %c0_26] : memref<2x1xf32, #tpu.memory_space<vmem>>, vector<2x1xf32>
    tpu.vector_store %arg14[%c0_25, %c0_26], %63 {strides = array<i32>} : memref<2x1xf32, #tpu.memory_space<vmem>>, vector<2x1xf32>,
    %c0_27 = arith.constant 0 : index
    %c0_28 = arith.constant 0 : index
    %65 = vector.load %arg15[%c0_27, %c0_28] : memref<2x1xf32, #tpu.memory_space<vmem>>, vector<2x1xf32>
    %cst_29 = arith.constant dense<0.000000e+00> : vector<2xf32>
    %66 = vector.multi_reduction <add>, %52, %cst_29 [1] : vector<2x128xf32> to vector<2xf32>
    %67 = vector.shape_cast %66 : vector<2xf32> to vector<2x1xf32>
    %68 = arith.addf %65, %67 : vector<2x1xf32>
    %c0_30 = arith.constant 0 : index
    %c0_31 = arith.constant 0 : index
    %69 = vector.load %arg15[%c0_30, %c0_31] : memref<2x1xf32, #tpu.memory_space<vmem>>, vector<2x1xf32>
    tpu.vector_store %arg15[%c0_30, %c0_31], %68 {strides = array<i32>} : memref<2x1xf32, #tpu.memory_space<vmem>>, vector<2x1xf32>,
    %c0_32 = arith.constant 0 : index
    %c0_33 = arith.constant 0 : index
    %70 = vector.load %arg16[%c0_32, %c0_33] : memref<2x1xf32, #tpu.memory_space<vmem>>, vector<2x1xf32>
    %cst_34 = arith.constant dense<0.000000e+00> : vector<2xf32>
    %71 = vector.multi_reduction <add>, %59, %cst_34 [1] : vector<2x128xf32> to vector<2xf32>
    %72 = vector.shape_cast %71 : vector<2xf32> to vector<2x1xf32>
    %73 = arith.addf %70, %72 : vector<2x1xf32>
    %c0_35 = arith.constant 0 : index
    %c0_36 = arith.constant 0 : index
    %74 = vector.load %arg16[%c0_35, %c0_36] : memref<2x1xf32, #tpu.memory_space<vmem>>, vector<2x1xf32>
    tpu.vector_store %arg16[%c0_35, %c0_36], %73 {strides = array<i32>} : memref<2x1xf32, #tpu.memory_space<vmem>>, vector<2x1xf32>,
    %cst_37 = arith.constant dense<0.000000e+00> : vector<2xf32>
    %75 = vector.multi_reduction <add>, %8, %cst_37 [1] : vector<2x128xf32> to vector<2xf32>
    %76 = vector.shape_cast %75 : vector<2xf32> to vector<2x1xf32>
    %77 = tpu.iota {dimensions = array<i32: 1>} : vector<2x2xi32>
    %cst_38 = arith.constant 0.000000e+00 : f32
    %78 = vector.broadcast %cst_38 : f32 to vector<2x2xf32>
    %79 = vector.extract_strided_slice %3 {offsets = [0, 0], sizes = [1, 128], strides = [1, 1]} : vector<2x128xf32> to vector<1x128xf32>
    %80 = vector.broadcast %79 : vector<1x128xf32> to vector<2x128xf32>
    %81 = arith.subf %5, %80 : vector<2x128xf32>
    %82 = arith.mulf %81, %81 : vector<2x128xf32>
    %83 = vector.extract_strided_slice %7 {offsets = [0, 0], sizes = [1, 128], strides = [1, 1]} : vector<2x128xf32> to vector<1x128xf32>
    %84 = vector.broadcast %83 : vector<1x128xf32> to vector<2x128xf32>
    %85 = arith.addf %82, %84 : vector<2x128xf32>
    %cst_39 = arith.constant dense<0.000000e+00> : vector<2xf32>
    %86 = vector.multi_reduction <add>, %85, %cst_39 [1] : vector<2x128xf32> to vector<2xf32>
    %87 = vector.shape_cast %86 : vector<2xf32> to vector<2x1xf32>
    %c0_i32_40 = arith.constant 0 : i32
    %88 = vector.broadcast %c0_i32_40 : i32 to vector<2x2xi32>
    %89 = arith.cmpi eq, %77, %88 : vector<2x2xi32>
    %cst_41 = arith.constant 0.000000e+00 : f32
    %90 = vector.shape_cast %87 : vector<2x1xf32> to vector<2x1xf32>
    %91 = vector.broadcast %90 : vector<2x1xf32> to vector<2x2xf32>
    %92 = vector.broadcast %cst_41 : f32 to vector<2x2xf32>
    %93 = arith.select %89, %91, %92 : vector<2x2xi1>, vector<2x2xf32>
    %94 = arith.addf %78, %93 : vector<2x2xf32>
    %95 = vector.extract_strided_slice %3 {offsets = [1, 0], sizes = [1, 128], strides = [1, 1]} : vector<2x128xf32> to vector<1x128xf32>
    %96 = vector.broadcast %95 : vector<1x128xf32> to vector<2x128xf32>
    %97 = arith.subf %5, %96 : vector<2x128xf32>
    %98 = arith.mulf %97, %97 : vector<2x128xf32>
    %99 = vector.extract_strided_slice %7 {offsets = [1, 0], sizes = [1, 128], strides = [1, 1]} : vector<2x128xf32> to vector<1x128xf32>
    %100 = vector.broadcast %99 : vector<1x128xf32> to vector<2x128xf32>
    %101 = arith.addf %98, %100 : vector<2x128xf32>
    %cst_42 = arith.constant dense<0.000000e+00> : vector<2xf32>
    %102 = vector.multi_reduction <add>, %101, %cst_42 [1] : vector<2x128xf32> to vector<2xf32>
    %103 = vector.shape_cast %102 : vector<2xf32> to vector<2x1xf32>
    %c1_i32 = arith.constant 1 : i32
    %104 = vector.broadcast %c1_i32 : i32 to vector<2x2xi32>
    %105 = arith.cmpi eq, %77, %104 : vector<2x2xi32>
    %cst_43 = arith.constant 0.000000e+00 : f32
    %106 = vector.shape_cast %103 : vector<2x1xf32> to vector<2x1xf32>
    %107 = vector.broadcast %106 : vector<2x1xf32> to vector<2x2xf32>
    %108 = vector.broadcast %cst_43 : f32 to vector<2x2xf32>
    %109 = arith.select %105, %107, %108 : vector<2x2xi1>, vector<2x2xf32>
    %110 = arith.addf %94, %109 : vector<2x2xf32>
    %c0_44 = arith.constant 0 : index
    %c0_45 = arith.constant 0 : index
    %111 = vector.load %arg17[%c0_44, %c0_45] : memref<2x2xf32, #tpu.memory_space<vmem>>, vector<2x2xf32>
    %112 = vector.broadcast %76 : vector<2x1xf32> to vector<2x2xf32>
    %113 = arith.addf %110, %112 : vector<2x2xf32>
    %114 = arith.addf %111, %113 : vector<2x2xf32>
    %c0_46 = arith.constant 0 : index
    %c0_47 = arith.constant 0 : index
    %115 = vector.load %arg17[%c0_46, %c0_47] : memref<2x2xf32, #tpu.memory_space<vmem>>, vector<2x2xf32>
    tpu.vector_store %arg17[%c0_46, %c0_47], %114 {strides = array<i32>} : memref<2x2xf32, #tpu.memory_space<vmem>>, vector<2x2xf32>,
    %c1_i32_48 = arith.constant 1 : i32
    %116 = arith.cmpi eq, %arg0, %c1_i32_48 : i32
    %117 = arith.extui %116 : i1 to i32
    %c0_i32_49 = arith.constant 0 : i32
    %118 = arith.cmpi ne, %117, %c0_i32_49 : i32
    scf.if %118 {
      %c0_50 = arith.constant 0 : index
      %119 = memref.load %arg8[%c0_50] : memref<1xf32, #tpu.memory_space<smem>>
      %c0_51 = arith.constant 0 : index
      %120 = memref.load %arg9[%c0_51] : memref<1xf32, #tpu.memory_space<smem>>
      %c0_52 = arith.constant 0 : index
      %c0_53 = arith.constant 0 : index
      %121 = vector.load %arg17[%c0_52, %c0_53] : memref<2x2xf32, #tpu.memory_space<vmem>>, vector<2x2xf32>
      %122 = vector.broadcast %119 : f32 to vector<2x2xf32>
      %123 = arith.mulf %122, %121 : vector<2x2xf32>
      %124 = vector.broadcast %120 : f32 to vector<2x2xf32>
      %125 = arith.subf %124, %123 : vector<2x2xf32>
      %126 = tpu.iota {dimensions = array<i32: 0>} : vector<2x2xi32>
      %127 = tpu.iota {dimensions = array<i32: 1>} : vector<2x2xi32>
      %128 = arith.cmpi eq, %126, %127 : vector<2x2xi32>
      %129 = arith.extui %128 : vector<2x2xi1> to vector<2x2xi32>
      %130 = arith.sitofp %129 : vector<2x2xi32> to vector<2x2xf32>
      %cst_54 = arith.constant 0.000000e+00 : f32
      %131 = vector.broadcast %cst_54 : f32 to vector<2x2xf32>
      %132 = arith.maximumf %125, %131 : vector<2x2xf32>
      %133 = arith.mulf %125, %130 : vector<2x2xf32>
      %134 = arith.subf %132, %133 : vector<2x2xf32>
      %135 = math.absf %125 : vector<2x2xf32>
      %cst_55 = arith.constant 0.000000e+00 : f32
      %136 = vector.broadcast %cst_55 : f32 to vector<2x2xf32>
      %137 = arith.subf %136, %135 : vector<2x2xf32>
      %138 = math.exp %137 : vector<2x2xf32>
      %cst_56 = arith.constant 1.000000e+00 : f32
      %139 = vector.broadcast %cst_56 : f32 to vector<2x2xf32>
      %140 = arith.addf %139, %138 : vector<2x2xf32>
      %141 = math.log %140 : vector<2x2xf32>
      %142 = arith.addf %134, %141 : vector<2x2xf32>
      %143 = vector.shape_cast %142 : vector<2x2xf32> to vector<1x2x2xf32>
      %cst_57 = arith.constant dense<0.000000e+00> : vector<1xf32>
      %144 = vector.multi_reduction <add>, %143, %cst_57 [1, 2] : vector<1x2x2xf32> to vector<1xf32>
      %145 = vector.shape_cast %144 : vector<1xf32> to vector<1x1x1xf32>
      %146 = vector.extract %145[0, 0, 0] : f32 from vector<1x1x1xf32>
      %c0_58 = arith.constant 0 : index
      %c0_59 = arith.constant 0 : index
      %147 = vector.load %arg14[%c0_58, %c0_59] : memref<2x1xf32, #tpu.memory_space<vmem>>, vector<2x1xf32>
      %cst_60 = arith.constant -5.000000e-01 : f32
      %148 = vector.broadcast %cst_60 : f32 to vector<2x1xf32>
      %149 = arith.mulf %148, %147 : vector<2x1xf32>
      %c0_61 = arith.constant 0 : index
      %c0_62 = arith.constant 0 : index
      %150 = vector.load %arg15[%c0_61, %c0_62] : memref<2x1xf32, #tpu.memory_space<vmem>>, vector<2x1xf32>
      %cst_63 = arith.constant -5.000000e-01 : f32
      %151 = vector.broadcast %cst_63 : f32 to vector<2x1xf32>
      %152 = arith.mulf %151, %150 : vector<2x1xf32>
      %c0_64 = arith.constant 0 : index
      %c0_65 = arith.constant 0 : index
      %153 = vector.load %arg16[%c0_64, %c0_65] : memref<2x1xf32, #tpu.memory_space<vmem>>, vector<2x1xf32>
      %cst_66 = arith.constant -5.000000e-01 : f32
      %154 = vector.broadcast %cst_66 : f32 to vector<2x1xf32>
      %155 = arith.mulf %154, %153 : vector<2x1xf32>
      %156 = tpu.iota {dimensions = array<i32: 1>} : vector<2x128xi32>
      %c0_i32_67 = arith.constant 0 : i32
      %157 = vector.broadcast %c0_i32_67 : i32 to vector<2x128xi32>
      %158 = arith.cmpi eq, %156, %157 : vector<2x128xi32>
      %cst_68 = arith.constant 0.000000e+00 : f32
      %159 = vector.shape_cast %149 : vector<2x1xf32> to vector<2x1xf32>
      %160 = vector.broadcast %159 : vector<2x1xf32> to vector<2x128xf32>
      %161 = vector.broadcast %cst_68 : f32 to vector<2x128xf32>
      %162 = arith.select %158, %160, %161 : vector<2x128xi1>, vector<2x128xf32>
      %c1_i32_69 = arith.constant 1 : i32
      %163 = vector.broadcast %c1_i32_69 : i32 to vector<2x128xi32>
      %164 = arith.cmpi eq, %156, %163 : vector<2x128xi32>
      %cst_70 = arith.constant 0.000000e+00 : f32
      %165 = vector.shape_cast %152 : vector<2x1xf32> to vector<2x1xf32>
      %166 = vector.broadcast %165 : vector<2x1xf32> to vector<2x128xf32>
      %167 = vector.broadcast %cst_70 : f32 to vector<2x128xf32>
      %168 = arith.select %164, %166, %167 : vector<2x128xi1>, vector<2x128xf32>
      %169 = arith.addf %162, %168 : vector<2x128xf32>
      %c2_i32 = arith.constant 2 : i32
      %170 = vector.broadcast %c2_i32 : i32 to vector<2x128xi32>
      %171 = arith.cmpi eq, %156, %170 : vector<2x128xi32>
      %cst_71 = arith.constant 0.000000e+00 : f32
      %172 = vector.shape_cast %155 : vector<2x1xf32> to vector<2x1xf32>
      %173 = vector.broadcast %172 : vector<2x1xf32> to vector<2x128xf32>
      %174 = vector.broadcast %cst_71 : f32 to vector<2x128xf32>
      %175 = arith.select %171, %173, %174 : vector<2x128xi1>, vector<2x128xf32>
      %176 = arith.addf %169, %175 : vector<2x128xf32>
      %c3_i32 = arith.constant 3 : i32
      %177 = vector.broadcast %c3_i32 : i32 to vector<2x128xi32>
      %178 = arith.cmpi eq, %156, %177 : vector<2x128xi32>
      %cst_72 = arith.constant 0.000000e+00 : f32
      %179 = vector.broadcast %146 : f32 to vector<2x128xf32>
      %180 = vector.broadcast %cst_72 : f32 to vector<2x128xf32>
      %181 = arith.select %178, %179, %180 : vector<2x128xi1>, vector<2x128xf32>
      %182 = arith.addf %176, %181 : vector<2x128xf32>
      %c0_73 = arith.constant 0 : index
      %c0_74 = arith.constant 0 : index
      %183 = vector.load %arg13[%c0_73, %c0_74] : memref<2x128xf32, #tpu.memory_space<vmem>>, vector<2x128xf32>
      tpu.vector_store %arg13[%c0_73, %c0_74], %182 {strides = array<i32>} : memref<2x128xf32, #tpu.memory_space<vmem>>, vector<2x128xf32>,
    } else {
    }
    return
  }
  func.func @transform_0(%arg0: i32) -> (i32, i32) {
    %c0_i32 = arith.constant 0 : i32
    %c0_i32_0 = arith.constant 0 : i32
    return %c0_i32, %arg0 : i32, i32
  }
  func.func @transform_1(%arg0: i32) -> (i32, i32) {
    %c0_i32 = arith.constant 0 : i32
    %c0_i32_0 = arith.constant 0 : i32
    return %c0_i32, %arg0 : i32, i32
  }
  func.func @transform_2(%arg0: i32) -> (i32, i32) {
    %c0_i32 = arith.constant 0 : i32
    %c0_i32_0 = arith.constant 0 : i32
    return %c0_i32, %arg0 : i32, i32
  }
  func.func @transform_3(%arg0: i32) -> (i32, i32) {
    %c0_i32 = arith.constant 0 : i32
    %c0_i32_0 = arith.constant 0 : i32
    return %c0_i32, %arg0 : i32, i32
  }
  func.func @transform_4(%arg0: i32) -> (i32, i32) {
    %c0_i32 = arith.constant 0 : i32
    %c0_i32_0 = arith.constant 0 : i32
    return %c0_i32, %arg0 : i32, i32
  }
  func.func @transform_5(%arg0: i32) -> (i32, i32) {
    %c0_i32 = arith.constant 0 : i32
    %c0_i32_0 = arith.constant 0 : i32
    return %c0_i32, %arg0 : i32, i32
  }
  func.func @transform_6(%arg0: i32) -> (i32, i32) {
    %c0_i32 = arith.constant 0 : i32
    %c0_i32_0 = arith.constant 0 : i32
    return %c0_i32, %arg0 : i32, i32
  }
  func.func @transform_7(%arg0: i32) -> i32 {
    %c0_i32 = arith.constant 0 : i32
    %c0_i32_0 = arith.constant 0 : i32
    return %c0_i32 : i32
  }
  func.func @transform_8(%arg0: i32) -> i32 {
    %c0_i32 = arith.constant 0 : i32
    %c0_i32_0 = arith.constant 0 : i32
    return %c0_i32 : i32
  }
  func.func @transform_9(%arg0: i32) -> (i32, i32) {
    %c0_i32 = arith.constant 0 : i32
    %c0_i32_0 = arith.constant 0 : i32
    return %c0_i32, %arg0 : i32, i32
  }
  func.func @transform_10(%arg0: i32) -> (i32, i32) {
    %c0_i32 = arith.constant 0 : i32
    %c0_i32_0 = arith.constant 0 : i32
    return %c0_i32, %arg0 : i32, i32
  }
  func.func @transform_11(%arg0: i32) -> (i32, i32) {
    %c0_i32 = arith.constant 0 : i32
    %c0_i32_0 = arith.constant 0 : i32
    return %c0_i32, %arg0 : i32, i32
  }
  func.func @transform_12(%arg0: i32) -> (i32, i32) {
    %c0_i32 = arith.constant 0 : i32
    %c0_i32_0 = arith.constant 0 : i32
    %c0_i32_1 = arith.constant 0 : i32
    return %c0_i32, %c0_i32_0 : i32, i32
  }
}

</mosaic_0001>

<llo_original>
// kernel: tpu_custom_call.1
$region0: #{tpu_custom_call.1}
  #allocation0 [shape = 'u32[]', space=smem, size = 0x4, offset = 0x4, fixed_abs, tag = 'smem constant byte address 0x4 - core index']
  #allocation1 [shape = 'u32[144,128]{1,0:T(1,128)}', space=vmem, size = 0x12000, scoped, tag = 'internal scratch']
  #allocation2 [shape = 'f32[2,1]{1,0:T(2,128)}', space=vmem, size = 0x400, scoped, tag = 'scratch operand']
  #allocation3 [shape = 'f32[2,1]{1,0:T(2,128)}', space=vmem, size = 0x400, scoped, tag = 'scratch operand']
  #allocation4 [shape = 'f32[2,1]{1,0:T(2,128)}', space=vmem, size = 0x400, scoped, tag = 'scratch operand']
  #allocation5 [shape = 'f32[2,2]{1,0:T(2,128)}', space=vmem, size = 0x400, scoped, tag = 'scratch operand']
  #allocation6 [shape = 'f32[1]{0:T(128)S(6)}', space=smem, size = 0x200, scoped, tag = 'scoped memory for tpu_custom_call.1']
  #allocation7 [shape = 'f32[1]{0:T(128)S(6)}', space=smem, size = 0x200, scoped, tag = 'scoped memory for tpu_custom_call.1']
  %s0 = inlined_call_operand.vmem [shape: f32[2,256], index: 0, kind: input, shape index: {}]
  %s1 = inlined_call_operand.vmem [shape: f32[2,256], index: 1, kind: input, shape index: {}]
  %s2 = inlined_call_operand.vmem [shape: f32[2,256], index: 2, kind: input, shape index: {}]
  %s3 = inlined_call_operand.vmem [shape: f32[2,256], index: 3, kind: input, shape index: {}]
  %s4 = inlined_call_operand.vmem [shape: f32[2,256], index: 4, kind: input, shape index: {}]
  %s5 = inlined_call_operand.vmem [shape: f32[2,256], index: 5, kind: input, shape index: {}]
  %s6 = inlined_call_operand.vmem [shape: f32[2,256], index: 6, kind: input, shape index: {}]
  %s7 = inlined_call_operand.<no memory space> [shape: f32[1], index: 7, kind: input, shape index: {}]
  %s8 = inlined_call_operand.<no memory space> [shape: f32[1], index: 8, kind: input, shape index: {}]
  %s9 = inlined_call_operand.hbm [shape: f32[2,256], index: 9, kind: output, shape index: {0}]
  %s10 = inlined_call_operand.hbm [shape: f32[2,256], index: 10, kind: output, shape index: {1}]
  %s11 = inlined_call_operand.hbm [shape: f32[2,256], index: 11, kind: output, shape index: {2}]
  %s12 = inlined_call_operand.hbm [shape: f32[2,128], index: 12, kind: output, shape index: {3}]
  %13 = xla_tuple %s9, %s10, %s11, %s12
  %s14 = sld [smem:[#allocation0]]
  $region101: #{tpu_custom_call.1} parent=0
    _
  %s16 = ssub.s32 1, %s14
  %s17 = scalar_select 0, %s16, %s14
  %18 = sst [smem:[#allocation6]] %s7
  %19 = sst [smem:[#allocation7]] %s8
  $region1: #{tpu_custom_call.1} parent=0
    #allocation8 [shape = 'u8[2048]{0}', space=vmem, size = 0x800, scoped, tag = 'output window, operand 0']
    #allocation9 [shape = 's32[2]{0}', space=sflag, size = 0x8, scoped, tag = 'scoped memory for tpu_custom_call.1']
    #allocation10 [shape = 'u8[2048]{0}', space=vmem, size = 0x800, scoped, tag = 'output window, operand 1']
    #allocation11 [shape = 's32[2]{0}', space=sflag, size = 0x8, scoped, tag = 'scoped memory for tpu_custom_call.1']
    #allocation12 [shape = 'u8[2048]{0}', space=vmem, size = 0x800, scoped, tag = 'output window, operand 2']
    #allocation13 [shape = 'u8[1024]{0}', space=vmem, size = 0x400, scoped, tag = 'output window, operand 3, single buffered']
    #allocation14 [shape = 's32[1]{0}', space=sflag, size = 0x4, scoped, tag = 'scoped memory for tpu_custom_call.1']
    %20 = vsyncpa [#allocation9], 0
    %s21 = scalar_lea.sflag [#allocation9], 1
    %22 = vsyncpa %s21, 0
    %23 = vsyncpa [#allocation11], 0
    %s24 = scalar_lea.sflag [#allocation11], 1
    %25 = vsyncpa %s24, 0
    %26 = vsyncpa [#allocation14], 0
    loop: start=0, step=1, limit=4
    $region2: #{tpu_custom_call.1} parent=1 // loop_pre_header
      _
    $region3: #{tpu_custom_call.1} parent=1 // loop_header
      %s28 = sphi 0, %s32
      %p29 = scmp.ge.s32.totalorder %s28, 4
      %s38 = sphi 0, %s40
      %s41 = sphi 0, %s38
      %s42 = sphi 0, %s41
      %s58 = sphi 0, %s42
      %s64 = sphi 0, %s66
      %s67 = sphi 0, %s64
      %s68 = sphi 0, %s67
      %s84 = sphi 0, %s68
      %s90 = sphi 0, %s92
      %s93 = sphi 0, %s90
      %s94 = sphi 0, %s93
      %s110 = sphi 0, %s94
      %s116 = sphi 0, %s118
      %s119 = sphi 0, %s116
      %s120 = sphi 0, %s119
      %s136 = sphi 0, %s120
      %s142 = sphi 0, %s144
      %s145 = sphi 0, %s142
      %s146 = sphi 0, %s145
      %s162 = sphi 0, %s146
      %s168 = sphi 0, %s170
      %s171 = sphi 0, %s168
      %s172 = sphi 0, %s171
      %s188 = sphi 0, %s172
      %s194 = sphi 0, %s196
      %s197 = sphi 0, %s194
      %s198 = sphi 0, %s197
      %s214 = sphi 0, %s198
      %s218 = sphi 0, %s218
      %s220 = sphi 0, %s218
      %s221 = sphi 0, %s220
      %s235 = sphi 0, %s221
      %s239 = sphi 0, %s239
      %s241 = sphi 0, %s239
      %s242 = sphi 0, %s241
      %s256 = sphi 0, %s242
      %s262 = sphi 0, %s264
      %s265 = sphi 0, %s262
      %s266 = sphi 0, %s265
      %s282 = sphi 0, %s266
      %s288 = sphi 0, %s290
      %s291 = sphi 0, %s288
      %s292 = sphi 0, %s291
      %s308 = sphi 0, %s292
      %s314 = sphi 0, %s316
      %s317 = sphi 0, %s314
      %s318 = sphi 0, %s317
      %s334 = sphi 0, %s318
      %s338 = sphi 0, %s338
      %s340 = sphi 0, %s338
      %s341 = sphi 0, %s340
      %s355 = sphi 0, %s341
    $region4: #{tpu_custom_call.1} parent=1 // loop_header_branch
      %31 = sbr.rel (%p29) target = $region8
    $region5: #{tpu_custom_call.1} parent=1 // loop_body
      %s33 = ssub.s32 %s28, 1
      %s34 = ssub.s32 %s28, 2
      %s35 = sadd.s32 %s28, 1
      %s36 = ssub.s32 %s28, %s35
      %p37 = scmp.eq.s32.totalorder %s36, 0
      %s39 = sadd.s32 %s38, 1
      %s40 = scalar_select %p37, %s38, %s39
      %p43 = pneg %p37
      %p44 = scmp.eq.s32.totalorder %s28, 1
      %p45 = por %p43, %p44
      %p46 = scmp.ne.s32.totalorder %s38, %s41
      %p47 = scmp.eq.s32.totalorder %s28, 0
      %p48 = por %p46, %p47
      %p49 = scmp.ne.s32.totalorder %s38, %s41
      %p50 = scmp.eq.s32.totalorder %s33, 1
      %p51 = por %p49, %p50
      %p52 = scmp.ne.s32.totalorder %s41, %s42
      %p53 = scmp.eq.s32.totalorder %s33, 0
      %p54 = por %p52, %p53
      %p55 = scmp.ne.s32.totalorder %s41, %s42
      %p56 = scmp.eq.s32.totalorder %s34, 1
      %p57 = por %p55, %p56
      %p59 = scmp.ne.s32.totalorder %s42, %s58
      %p60 = scmp.eq.s32.totalorder %s34, 0
      %p61 = por %p59, %p60
      %s62 = ssub.s32 %s28, %s35
      %p63 = scmp.eq.s32.totalorder %s62, 0
      %s65 = sadd.s32 %s64, 1
      %s66 = scalar_select %p63, %s64, %s65
      %p69 = pneg %p63
      %p70 = scmp.eq.s32.totalorder %s28, 1
      %p71 = por %p69, %p70
      %p72 = scmp.ne.s32.totalorder %s64, %s67
      %p73 = scmp.eq.s32.totalorder %s28, 0
      %p74 = por %p72, %p73
      %p75 = scmp.ne.s32.totalorder %s64, %s67
      %p76 = scmp.eq.s32.totalorder %s33, 1
      %p77 = por %p75, %p76
      %p78 = scmp.ne.s32.totalorder %s67, %s68
      %p79 = scmp.eq.s32.totalorder %s33, 0
      %p80 = por %p78, %p79
      %p81 = scmp.ne.s32.totalorder %s67, %s68
      %p82 = scmp.eq.s32.totalorder %s34, 1
      %p83 = por %p81, %p82
      %p85 = scmp.ne.s32.totalorder %s68, %s84
      %p86 = scmp.eq.s32.totalorder %s34, 0
      %p87 = por %p85, %p86
      %s88 = ssub.s32 %s28, %s35
      %p89 = scmp.eq.s32.totalorder %s88, 0
      %s91 = sadd.s32 %s90, 1
      %s92 = scalar_select %p89, %s90, %s91
      %p95 = pneg %p89
      %p96 = scmp.eq.s32.totalorder %s28, 1
      %p97 = por %p95, %p96
      %p98 = scmp.ne.s32.totalorder %s90, %s93
      %p99 = scmp.eq.s32.totalorder %s28, 0
      %p100 = por %p98, %p99
      %p101 = scmp.ne.s32.totalorder %s90, %s93
      %p102 = scmp.eq.s32.totalorder %s33, 1
      %p103 = por %p101, %p102
      %p104 = scmp.ne.s32.totalorder %s93, %s94
      %p105 = scmp.eq.s32.totalorder %s33, 0
      %p106 = por %p104, %p105
      %p107 = scmp.ne.s32.totalorder %s93, %s94
      %p108 = scmp.eq.s32.totalorder %s34, 1
      %p109 = por %p107, %p108
      %p111 = scmp.ne.s32.totalorder %s94, %s110
      %p112 = scmp.eq.s32.totalorder %s34, 0
      %p113 = por %p111, %p112
      %s114 = ssub.s32 %s28, %s35
      %p115 = scmp.eq.s32.totalorder %s114, 0
      %s117 = sadd.s32 %s116, 1
      %s118 = scalar_select %p115, %s116, %s117
      %p121 = pneg %p115
      %p122 = scmp.eq.s32.totalorder %s28, 1
      %p123 = por %p121, %p122
      %p124 = scmp.ne.s32.totalorder %s116, %s119
      %p125 = scmp.eq.s32.totalorder %s28, 0
      %p126 = por %p124, %p125
      %p127 = scmp.ne.s32.totalorder %s116, %s119
      %p128 = scmp.eq.s32.totalorder %s33, 1
      %p129 = por %p127, %p128
      %p130 = scmp.ne.s32.totalorder %s119, %s120
      %p131 = scmp.eq.s32.totalorder %s33, 0
      %p132 = por %p130, %p131
      %p133 = scmp.ne.s32.totalorder %s119, %s120
      %p134 = scmp.eq.s32.totalorder %s34, 1
      %p135 = por %p133, %p134
      %p137 = scmp.ne.s32.totalorder %s120, %s136
      %p138 = scmp.eq.s32.totalorder %s34, 0
      %p139 = por %p137, %p138
      %s140 = ssub.s32 %s28, %s35
      %p141 = scmp.eq.s32.totalorder %s140, 0
      %s143 = sadd.s32 %s142, 1
      %s144 = scalar_select %p141, %s142, %s143
      %p147 = pneg %p141
      %p148 = scmp.eq.s32.totalorder %s28, 1
      %p149 = por %p147, %p148
      %p150 = scmp.ne.s32.totalorder %s142, %s145
      %p151 = scmp.eq.s32.totalorder %s28, 0
      %p152 = por %p150, %p151
      %p153 = scmp.ne.s32.totalorder %s142, %s145
      %p154 = scmp.eq.s32.totalorder %s33, 1
      %p155 = por %p153, %p154
      %p156 = scmp.ne.s32.totalorder %s145, %s146
      %p157 = scmp.eq.s32.totalorder %s33, 0
      %p158 = por %p156, %p157
      %p159 = scmp.ne.s32.totalorder %s145, %s146
      %p160 = scmp.eq.s32.totalorder %s34, 1
      %p161 = por %p159, %p160
      %p163 = scmp.ne.s32.totalorder %s146, %s162
      %p164 = scmp.eq.s32.totalorder %s34, 0
      %p165 = por %p163, %p164
      %s166 = ssub.s32 %s28, %s35
      %p167 = scmp.eq.s32.totalorder %s166, 0
      %s169 = sadd.s32 %s168, 1
      %s170 = scalar_select %p167, %s168, %s169
      %p173 = pneg %p167
      %p174 = scmp.eq.s32.totalorder %s28, 1
      %p175 = por %p173, %p174
      %p176 = scmp.ne.s32.totalorder %s168, %s171
      %p177 = scmp.eq.s32.totalorder %s28, 0
      %p178 = por %p176, %p177
      %p179 = scmp.ne.s32.totalorder %s168, %s171
      %p180 = scmp.eq.s32.totalorder %s33, 1
      %p181 = por %p179, %p180
      %p182 = scmp.ne.s32.totalorder %s171, %s172
      %p183 = scmp.eq.s32.totalorder %s33, 0
      %p184 = por %p182, %p183
      %p185 = scmp.ne.s32.totalorder %s171, %s172
      %p186 = scmp.eq.s32.totalorder %s34, 1
      %p187 = por %p185, %p186
      %p189 = scmp.ne.s32.totalorder %s172, %s188
      %p190 = scmp.eq.s32.totalorder %s34, 0
      %p191 = por %p189, %p190
      %s192 = ssub.s32 %s28, %s35
      %p193 = scmp.eq.s32.totalorder %s192, 0
      %s195 = sadd.s32 %s194, 1
      %s196 = scalar_select %p193, %s194, %s195
      %p199 = pneg %p193
      %p200 = scmp.eq.s32.totalorder %s28, 1
      %p201 = por %p199, %p200
      %p202 = scmp.ne.s32.totalorder %s194, %s197
      %p203 = scmp.eq.s32.totalorder %s28, 0
      %p204 = por %p202, %p203
      %p205 = scmp.ne.s32.totalorder %s194, %s197
      %p206 = scmp.eq.s32.totalorder %s33, 1
      %p207 = por %p205, %p206
      %p208 = scmp.ne.s32.totalorder %s197, %s198
      %p209 = scmp.eq.s32.totalorder %s33, 0
      %p210 = por %p208, %p209
      %p211 = scmp.ne.s32.totalorder %s197, %s198
      %p212 = scmp.eq.s32.totalorder %s34, 1
      %p213 = por %p211, %p212
      %p215 = scmp.ne.s32.totalorder %s198, %s214
      %p216 = scmp.eq.s32.totalorder %s34, 0
      %p217 = por %p215, %p216
      %s219 = sadd.s32 %s218, 1
      %p222 = scmp.eq.s32.totalorder %s28, 1
      %p223 = scmp.ne.s32.totalorder %s218, %s220
      %p224 = scmp.eq.s32.totalorder %s28, 0
      %p225 = por %p223, %p224
      %p226 = scmp.ne.s32.totalorder %s218, %s220
      %p227 = scmp.eq.s32.totalorder %s33, 1
      %p228 = por %p226, %p227
      %p229 = scmp.ne.s32.totalorder %s220, %s221
      %p230 = scmp.eq.s32.totalorder %s33, 0
      %p231 = por %p229, %p230
      %p232 = scmp.ne.s32.totalorder %s220, %s221
      %p233 = scmp.eq.s32.totalorder %s34, 1
      %p234 = por %p232, %p233
      %p236 = scmp.ne.s32.totalorder %s221, %s235
      %p237 = scmp.eq.s32.totalorder %s34, 0
      %p238 = por %p236, %p237
      %s240 = sadd.s32 %s239, 1
      %p243 = scmp.eq.s32.totalorder %s28, 1
      %p244 = scmp.ne.s32.totalorder %s239, %s241
      %p245 = scmp.eq.s32.totalorder %s28, 0
      %p246 = por %p244, %p245
      %p247 = scmp.ne.s32.totalorder %s239, %s241
      %p248 = scmp.eq.s32.totalorder %s33, 1
      %p249 = por %p247, %p248
      %p250 = scmp.ne.s32.totalorder %s241, %s242
      %p251 = scmp.eq.s32.totalorder %s33, 0
      %p252 = por %p250, %p251
      %p253 = scmp.ne.s32.totalorder %s241, %s242
      %p254 = scmp.eq.s32.totalorder %s34, 1
      %p255 = por %p253, %p254
      %p257 = scmp.ne.s32.totalorder %s242, %s256
      %p258 = scmp.eq.s32.totalorder %s34, 0
      %p259 = por %p257, %p258
      %s260 = ssub.s32 %s28, %s35
      %p261 = scmp.eq.s32.totalorder %s260, 0
      %s263 = sadd.s32 %s262, 1
      %s264 = scalar_select %p261, %s262, %s263
      %p267 = pneg %p261
      %p268 = scmp.eq.s32.totalorder %s28, 1
      %p269 = por %p267, %p268
      %p270 = scmp.ne.s32.totalorder %s262, %s265
      %p271 = scmp.eq.s32.totalorder %s28, 0
      %p272 = por %p270, %p271
      %p273 = scmp.ne.s32.totalorder %s262, %s265
      %p274 = scmp.eq.s32.totalorder %s33, 1
      %p275 = por %p273, %p274
      %p276 = scmp.ne.s32.totalorder %s265, %s266
      %p277 = scmp.eq.s32.totalorder %s33, 0
      %p278 = por %p276, %p277
      %p279 = scmp.ne.s32.totalorder %s265, %s266
      %p280 = scmp.eq.s32.totalorder %s34, 1
      %p281 = por %p279, %p280
      %p283 = scmp.ne.s32.totalorder %s266, %s282
      %p284 = scmp.eq.s32.totalorder %s34, 0
      %p285 = por %p283, %p284
      %s286 = ssub.s32 %s28, %s35
      %p287 = scmp.eq.s32.totalorder %s286, 0
      %s289 = sadd.s32 %s288, 1
      %s290 = scalar_select %p287, %s288, %s289
      %p293 = pneg %p287
      %p294 = scmp.eq.s32.totalorder %s28, 1
      %p295 = por %p293, %p294
      %p296 = scmp.ne.s32.totalorder %s288, %s291
      %p297 = scmp.eq.s32.totalorder %s28, 0
      %p298 = por %p296, %p297
      %p299 = scmp.ne.s32.totalorder %s288, %s291
      %p300 = scmp.eq.s32.totalorder %s33, 1
      %p301 = por %p299, %p300
      %p302 = scmp.ne.s32.totalorder %s291, %s292
      %p303 = scmp.eq.s32.totalorder %s33, 0
      %p304 = por %p302, %p303
      %p305 = scmp.ne.s32.totalorder %s291, %s292
      %p306 = scmp.eq.s32.totalorder %s34, 1
      %p307 = por %p305, %p306
      %p309 = scmp.ne.s32.totalorder %s292, %s308
      %p310 = scmp.eq.s32.totalorder %s34, 0
      %p311 = por %p309, %p310
      %s312 = ssub.s32 %s28, %s35
      %p313 = scmp.eq.s32.totalorder %s312, 0
      %s315 = sadd.s32 %s314, 1
      %s316 = scalar_select %p313, %s314, %s315
      %p319 = pneg %p313
      %p320 = scmp.eq.s32.totalorder %s28, 1
      %p321 = por %p319, %p320
      %p322 = scmp.ne.s32.totalorder %s314, %s317
      %p323 = scmp.eq.s32.totalorder %s28, 0
      %p324 = por %p322, %p323
      %p325 = scmp.ne.s32.totalorder %s314, %s317
      %p326 = scmp.eq.s32.totalorder %s33, 1
      %p327 = por %p325, %p326
      %p328 = scmp.ne.s32.totalorder %s317, %s318
      %p329 = scmp.eq.s32.totalorder %s33, 0
      %p330 = por %p328, %p329
      %p331 = scmp.ne.s32.totalorder %s317, %s318
      %p332 = scmp.eq.s32.totalorder %s34, 1
      %p333 = por %p331, %p332
      %p335 = scmp.ne.s32.totalorder %s318, %s334
      %p336 = scmp.eq.s32.totalorder %s34, 0
      %p337 = por %p335, %p336
      %s339 = sadd.s32 %s338, 1
      %p342 = scmp.eq.s32.totalorder %s28, 1
      %p343 = scmp.ne.s32.totalorder %s338, %s340
      %p344 = scmp.eq.s32.totalorder %s28, 0
      %p345 = por %p343, %p344
      %p346 = scmp.ne.s32.totalorder %s338, %s340
      %p347 = scmp.eq.s32.totalorder %s33, 1
      %p348 = por %p346, %p347
      %p349 = scmp.ne.s32.totalorder %s340, %s341
      %p350 = scmp.eq.s32.totalorder %s33, 0
      %p351 = por %p349, %p350
      %p352 = scmp.ne.s32.totalorder %s340, %s341
      %p353 = scmp.eq.s32.totalorder %s34, 1
      %p354 = por %p352, %p353
      %p356 = scmp.ne.s32.totalorder %s341, %s355
      %p357 = scmp.eq.s32.totalorder %s34, 0
      %p358 = por %p356, %p357
      %p359 = scmp.le.s32.totalorder 1, %s28
      %p360 = scmp.lt.s32.totalorder %s28, 3
      %p361 = pnand %p359, %p360
      %p362 = pneg %p361
      // Predicated region
      $region9: #{tpu_custom_call.1} parent=5 // pred_check
        _
      $region10: #{tpu_custom_call.1} parent=5 // pred_check_branch
        %364 = sbr.rel (%p361) target = $region12
      $region11: #{tpu_custom_call.1} parent=5 // pred_region
        %s365 = ssub.s32 %s28, 1
        // Predicated region
        $region13: #{tpu_custom_call.1} parent=11 // pred_check
          %p366 = pneg %p231
        $region14: #{tpu_custom_call.1} parent=11 // pred_check_branch
          %368 = sbr.rel (%p366) target = $region16
        $region15: #{tpu_custom_call.1} parent=11 // pred_region
          _
        $region16: #{tpu_custom_call.1} parent=11 // pred_fallthru
          _
        // Predicated region
        $region17: #{tpu_custom_call.1} parent=11 // pred_check
          %p369 = pneg %p252
        $region18: #{tpu_custom_call.1} parent=11 // pred_check_branch
          %371 = sbr.rel (%p369) target = $region20
        $region19: #{tpu_custom_call.1} parent=11 // pred_region
          _
        $region20: #{tpu_custom_call.1} parent=11 // pred_fallthru
          _
      $region12: #{tpu_custom_call.1} parent=5 // pred_fallthru
        _
      %p372 = scmp.lt.s32.totalorder %s28, 2
      // Predicated region
      $region21: #{tpu_custom_call.1} parent=5 // pred_check
        %p373 = pneg %p372
      $region22: #{tpu_custom_call.1} parent=5 // pred_check_branch
        %375 = sbr.rel (%p373) target = $region24
      $region23: #{tpu_custom_call.1} parent=5 // pred_region
        // Predicated region
        $region25: #{tpu_custom_call.1} parent=23 // pred_check
          %p376 = pneg %p48
        $region26: #{tpu_custom_call.1} parent=23 // pred_check_branch
          %378 = sbr.rel (%p376) target = $region28
        $region27: #{tpu_custom_call.1} parent=23 // pred_region
          %p379 = scmp.lt.s32.totalorder %s28, 1
          %s380 = scalar_select %p379, %s28, 1
          %s381 = smul.addr %s380, 2
          %s382 = scalar_lea.vmem %s0, %s381
        $region28: #{tpu_custom_call.1} parent=23 // pred_fallthru
          _
        // Predicated region
        $region29: #{tpu_custom_call.1} parent=23 // pred_check
          %p383 = pneg %p74
        $region30: #{tpu_custom_call.1} parent=23 // pred_check_branch
          %385 = sbr.rel (%p383) target = $region32
        $region31: #{tpu_custom_call.1} parent=23 // pred_region
          %p386 = scmp.lt.s32.totalorder %s28, 1
          %s387 = scalar_select %p386, %s28, 1
          %s388 = smul.addr %s387, 2
          %s389 = scalar_lea.vmem %s1, %s388
        $region32: #{tpu_custom_call.1} parent=23 // pred_fallthru
          _
        // Predicated region
        $region33: #{tpu_custom_call.1} parent=23 // pred_check
          %p390 = pneg %p100
        $region34: #{tpu_custom_call.1} parent=23 // pred_check_branch
          %392 = sbr.rel (%p390) target = $region36
        $region35: #{tpu_custom_call.1} parent=23 // pred_region
          %p393 = scmp.lt.s32.totalorder %s28, 1
          %s394 = scalar_select %p393, %s28, 1
          %s395 = smul.addr %s394, 2
          %s396 = scalar_lea.vmem %s2, %s395
        $region36: #{tpu_custom_call.1} parent=23 // pred_fallthru
          _
        // Predicated region
        $region37: #{tpu_custom_call.1} parent=23 // pred_check
          %p397 = pneg %p126
        $region38: #{tpu_custom_call.1} parent=23 // pred_check_branch
          %399 = sbr.rel (%p397) target = $region40
        $region39: #{tpu_custom_call.1} parent=23 // pred_region
          %p400 = scmp.lt.s32.totalorder %s28, 1
          %s401 = scalar_select %p400, %s28, 1
          %s402 = smul.addr %s401, 2
          %s403 = scalar_lea.vmem %s3, %s402
        $region40: #{tpu_custom_call.1} parent=23 // pred_fallthru
          _
        // Predicated region
        $region41: #{tpu_custom_call.1} parent=23 // pred_check
          %p404 = pneg %p152
        $region42: #{tpu_custom_call.1} parent=23 // pred_check_branch
          %406 = sbr.rel (%p404) target = $region44
        $region43: #{tpu_custom_call.1} parent=23 // pred_region
          %p407 = scmp.lt.s32.totalorder %s28, 1
          %s408 = scalar_select %p407, %s28, 1
          %s409 = smul.addr %s408, 2
          %s410 = scalar_lea.vmem %s4, %s409
        $region44: #{tpu_custom_call.1} parent=23 // pred_fallthru
          _
        // Predicated region
        $region45: #{tpu_custom_call.1} parent=23 // pred_check
          %p411 = pneg %p178
        $region46: #{tpu_custom_call.1} parent=23 // pred_check_branch
          %413 = sbr.rel (%p411) target = $region48
        $region47: #{tpu_custom_call.1} parent=23 // pred_region
          %p414 = scmp.lt.s32.totalorder %s28, 1
          %s415 = scalar_select %p414, %s28, 1
          %s416 = smul.addr %s415, 2
          %s417 = scalar_lea.vmem %s5, %s416
        $region48: #{tpu_custom_call.1} parent=23 // pred_fallthru
          _
        // Predicated region
        $region49: #{tpu_custom_call.1} parent=23 // pred_check
          %p418 = pneg %p204
        $region50: #{tpu_custom_call.1} parent=23 // pred_check_branch
          %420 = sbr.rel (%p418) target = $region52
        $region51: #{tpu_custom_call.1} parent=23 // pred_region
          %p421 = scmp.lt.s32.totalorder %s28, 1
          %s422 = scalar_select %p421, %s28, 1
          %s423 = smul.addr %s422, 2
          %s424 = scalar_lea.vmem %s6, %s423
        $region52: #{tpu_custom_call.1} parent=23 // pred_fallthru
          _
      $region24: #{tpu_custom_call.1} parent=5 // pred_fallthru
        _
      %p425 = scmp.le.s32.totalorder 1, %s28
      %p426 = scmp.lt.s32.totalorder %s28, 3
      %p427 = pnand %p425, %p426
      %p428 = pneg %p427
      // Predicated region
      $region53: #{tpu_custom_call.1} parent=5 // pred_check
        _
      $region54: #{tpu_custom_call.1} parent=5 // pred_check_branch
        %430 = sbr.rel (%p427) target = $region56
      $region55: #{tpu_custom_call.1} parent=5 // pred_region
        %s431 = ssub.s32 %s28, 1
        %p432 = scmp.lt.s32.totalorder %s33, 1
        %s433 = scalar_select %p432, %s33, 1
        %s434 = smul.addr %s433, 2
        %s435 = scalar_lea.vmem %s0, %s434
        %p436 = pneg %p54
        %p437 = pneg %p51
        %p438 = scmp.lt.s32.totalorder %s33, 1
        %s439 = scalar_select %p438, %s33, 1
        %s440 = smul.addr %s439, 2
        %s441 = scalar_lea.vmem %s1, %s440
        %p442 = pneg %p80
        %p443 = pneg %p77
        %p444 = scmp.lt.s32.totalorder %s33, 1
        %s445 = scalar_select %p444, %s33, 1
        %s446 = smul.addr %s445, 2
        %s447 = scalar_lea.vmem %s2, %s446
        %p448 = pneg %p106
        %p449 = pneg %p103
        %p450 = scmp.lt.s32.totalorder %s33, 1
        %s451 = scalar_select %p450, %s33, 1
        %s452 = smul.addr %s451, 2
        %s453 = scalar_lea.vmem %s3, %s452
        %p454 = pneg %p132
        %p455 = pneg %p129
        %p456 = scmp.lt.s32.totalorder %s33, 1
        %s457 = scalar_select %p456, %s33, 1
        %s458 = smul.addr %s457, 2
        %s459 = scalar_lea.vmem %s4, %s458
        %p460 = pneg %p158
        %p461 = pneg %p155
        %p462 = scmp.lt.s32.totalorder %s33, 1
        %s463 = scalar_select %p462, %s33, 1
        %s464 = smul.addr %s463, 2
        %s465 = scalar_lea.vmem %s5, %s464
        %p466 = pneg %p184
        %p467 = pneg %p181
        %p468 = scmp.lt.s32.totalorder %s33, 1
        %s469 = scalar_select %p468, %s33, 1
        %s470 = smul.addr %s469, 2
        %s471 = scalar_lea.vmem %s6, %s470
        %p472 = pneg %p210
        %p473 = pneg %p207
        %p474 = pneg %p231
        %p475 = pneg %p228
        %p476 = pneg %p252
        %p477 = pneg %p249
        %p478 = pneg %p278
        %p479 = pneg %p275
        %s480 = sand.u32 %s265, 1
        %s481 = scalar_lea.sflag [#allocation9], %s480
        %s482 = sand.u32 %s265, 1
        %s483 = smul.addr %s482, 2
        %s484 = scalar_lea.vmem [#allocation8], %s483
        %p485 = pneg %p304
        %p486 = pneg %p301
        %s487 = sand.u32 %s33, 1
        %s488 = scalar_lea.sflag [#allocation11], %s487
        %s489 = sand.u32 %s291, 1
        %s490 = smul.addr %s489, 2
        %s491 = scalar_lea.vmem [#allocation10], %s490
        %p492 = pneg %p330
        %p493 = pneg %p327
        %s494 = sand.u32 %s33, 1
        %s495 = scalar_lea.sflag [#allocation11], %s494
        %s496 = sand.u32 %s317, 1
        %s497 = smul.addr %s496, 2
        %s498 = scalar_lea.vmem [#allocation12], %s497
        %p499 = pneg %p351
        %p500 = pneg %p348
        %p501 = scmp.lt.s32.totalorder %s33, 1
        %s502 = scalar_select %p501, %s33, 1
        %s503 = smul.addr %s502, 2
        %s504 = scalar_lea.vmem %s0, %s503
        %p505 = scmp.lt.s32.totalorder %s33, 1
        %s506 = scalar_select %p505, %s33, 1
        %s507 = smul.addr %s506, 2
        %s508 = scalar_lea.vmem %s1, %s507
        %p509 = scmp.lt.s32.totalorder %s33, 1
        %s510 = scalar_select %p509, %s33, 1
        %s511 = smul.addr %s510, 2
        %s512 = scalar_lea.vmem %s2, %s511
        %p513 = scmp.lt.s32.totalorder %s33, 1
        %s514 = scalar_select %p513, %s33, 1
        %s515 = smul.addr %s514, 2
        %s516 = scalar_lea.vmem %s3, %s515
        %p517 = scmp.lt.s32.totalorder %s33, 1
        %s518 = scalar_select %p517, %s33, 1
        %s519 = smul.addr %s518, 2
        %s520 = scalar_lea.vmem %s4, %s519
        %p521 = scmp.lt.s32.totalorder %s33, 1
        %s522 = scalar_select %p521, %s33, 1
        %s523 = smul.addr %s522, 2
        %s524 = scalar_lea.vmem %s5, %s523
        %p525 = scmp.lt.s32.totalorder %s33, 1
        %s526 = scalar_select %p525, %s33, 1
        %s527 = smul.addr %s526, 2
        %s528 = scalar_lea.vmem %s6, %s527
        %p529 = scmp.eq.s32.totalorder %s33, 0
        // Predicated region
        $region57: #{tpu_custom_call.1} parent=55 // pred_check
          %p530 = pneg %p529
        $region58: #{tpu_custom_call.1} parent=55 // pred_check_branch
          %532 = sbr.rel (%p530) target = $region60
        $region59: #{tpu_custom_call.1} parent=55 // pred_region
          %vm533 = vcmask 1024
          %534 = vst.msk [vmem:[#allocation2] sm:$0x3] %vm533, 0.0
          %535 = vst.msk [vmem:[#allocation3] sm:$0x3] %vm533, 0.0
          %536 = vst.msk [vmem:[#allocation4] sm:$0x3] %vm533, 0.0
          %vm537 = vcmask 9216
          %538 = vst.msk [vmem:[#allocation5] sm:$0x3] %vm537, 0.0
        $region60: #{tpu_custom_call.1} parent=55 // pred_fallthru
          _
        %v539 = vld [vmem:[%s504] sm:$0x3]
        %v540 = vld [vmem:[%s508] sm:$0x3]
        %v541 = vld [vmem:[%s512] sm:$0x3]
        %v542 = vld [vmem:[%s516] sm:$0x3]
        %v543 = vmul.f32 %v540, 1.442695
        %v544 = vpow.pop %v543
        %v545 = vmul.f32 %v542, 1.442695
        %v546 = vpow.pop %v545
        %v547 = vadd.f32 %v544, %v546
        %v548 = vrcp.pop %v547
        %v549 = vrcp.pop %v544
        %v550 = vrcp.pop %v546
        %v551 = vlog2.pop %v547
        %v552 = vmul.f32 %v551, 0.6931472
        %v553 = vmul.f32 %v539, %v546
        %v554 = vmul.f32 %v541, %v544
        %v555 = vadd.f32 %v553, %v554
        %v556 = vmul.f32 %v555, %v548
        %v557 = vmul.f32 %v544, %v546
        %v558 = vmul.f32 %v557, %v548
        %v559 = vrsqrt.pop %v558
        %v560 = vmul.f32 %v558, %v559
        %vm561 = vcmp.eq.f32.partialorder %v558, inf
        %v562 = vsel %vm561, %v558, %v560
        %vm563 = vcmp.eq.f32.partialorder %v558, 0.0
        %v564 = vand.u32 %v558, 2147483648
        %v565 = vsel %vm563, %v564, %v562
        %v566 = vld [vmem:[%s520] sm:$0x3]
        %v567 = vmul.f32 %v565, %v566
        %v568 = vadd.f32 %v556, %v567
        %569 = vst [vmem:[%s484] sm:$0x3] %v568
        %v570 = vrsqrt.pop %v544
        %v571 = vmul.f32 %v544, %v570
        %vm572 = vcmp.eq.f32.partialorder %v544, inf
        %v573 = vsel %vm572, %v544, %v571
        %vm574 = vcmp.eq.f32.partialorder %v544, 0.0
        %v575 = vand.u32 %v544, 2147483648
        %v576 = vsel %vm574, %v575, %v573
        %v577 = vld [vmem:[%s524] sm:$0x3]
        %v578 = vmul.f32 %v576, %v577
        %v579 = vadd.f32 %v539, %v578
        %580 = vst [vmem:[%s491] sm:$0x3] %v579
        %v581 = vrsqrt.pop %v546
        %v582 = vmul.f32 %v546, %v581
        %vm583 = vcmp.eq.f32.partialorder %v546, inf
        %v584 = vsel %vm583, %v546, %v582
        %vm585 = vcmp.eq.f32.partialorder %v546, 0.0
        %v586 = vand.u32 %v546, 2147483648
        %v587 = vsel %vm585, %v586, %v584
        %v588 = vld [vmem:[%s528] sm:$0x3]
        %v589 = vmul.f32 %v587, %v588
        %v590 = vadd.f32 %v541, %v589
        %591 = vst [vmem:[%s498] sm:$0x3] %v590
        %v592 = vsub.f32 %v556, %v539
        %v593 = vsub.f32 %v556, %v541
        %v594 = vsub.f32 %v541, %v539
        %v595 = vmul.f32 %v594, %v594
        %v596 = vadd.f32 %v542, 1.0
        %v597 = vsub.f32 %v596, %v552
        %v598 = vmul.f32 %v592, %v592
        %v599 = vadd.f32 %v598, %v558
        %v600 = vmul.f32 %v599, %v549
        %v601 = vsub.f32 %v597, %v600
        %v602 = vadd.f32 %v540, 1.0
        %v603 = vsub.f32 %v602, %v552
        %v604 = vmul.f32 %v593, %v593
        %v605 = vadd.f32 %v604, %v558
        %v606 = vmul.f32 %v605, %v550
        %v607 = vsub.f32 %v603, %v606
        %v608 = vadd.f32 %v595, %v546
        %v609 = vmul.f32 %v608, %v549
        %v610 = vsub.f32 2.0, %v609
        %v611 = vadd.f32 %v595, %v544
        %v612 = vmul.f32 %v611, %v550
        %v613 = vsub.f32 %v610, %v612
        %v614 = vld [vmem:[#allocation2] sm:$0x3]
        %vm615 = vcmask 1041408
        %v616 = vsel %vm615, %v601, 0.0
        %617 = vadd.xlane.f32.xlu0 %v616
        %v618 = vpop.xlane.xlu0 %617
        %v619 = vadd.f32 %v614, %v618
        %vm620 = vcmask 1024
        %621 = vst.msk [vmem:[#allocation2] sm:$0x3] %vm620, %v619
        %v622 = vld [vmem:[#allocation3] sm:$0x3]
        %v623 = vsel %vm615, %v607, 0.0
        %624 = vadd.xlane.f32.xlu0 %v623
        %v625 = vpop.xlane.xlu0 %624
        %v626 = vadd.f32 %v622, %v625
        %627 = vst.msk [vmem:[#allocation3] sm:$0x3] %vm620, %v626
        %v628 = vld [vmem:[#allocation4] sm:$0x3]
        %v629 = vsel %vm615, %v613, 0.0
        %630 = vadd.xlane.f32.xlu0 %v629
        %v631 = vpop.xlane.xlu0 %630
        %v632 = vadd.f32 %v628, %v631
        %633 = vst.msk [vmem:[#allocation4] sm:$0x3] %vm620, %v632
        %v634 = vsel %vm615, %v546, 0.0
        %635 = vadd.xlane.f32.xlu0 %v634
        %v636 = vpop.xlane.xlu0 %635
        %v637 = vlaneseq
        %v638 = vand.u32 %v637, 127
        %v639 = vlaneseq
        %v640 = vshrl.u32 %v639, 7
        %v641 = vsub.s32 0, %v640
        %v642 = vrot.slane %v539, %v641
        %v643 = vsub.f32 %v541, %v642
        %v644 = vmul.f32 %v643, %v643
        %v645 = vlaneseq
        %v646 = vshrl.u32 %v645, 7
        %v647 = vsub.s32 0, %v646
        %v648 = vrot.slane %v544, %v647
        %v649 = vadd.f32 %v644, %v648
        %v650 = vsel %vm615, %v649, 0.0
        %651 = vadd.xlane.f32.xlu0 %v650
        %v652 = vpop.xlane.xlu0 %651
        %vm653 = vcmp.eq.s32.totalorder %v638, 0
        %v654 = vsel %vm653, %v652, 0.0
        %v655 = vadd.f32 %v654, 0.0
        %v656 = vlaneseq
        %v657 = vshrl.u32 %v656, 7
        %v658 = vsub.s32 1, %v657
        %v659 = vrot.slane %v539, %v658
        %v660 = vsub.f32 %v541, %v659
        %v661 = vmul.f32 %v660, %v660
        %v662 = vlaneseq
        %v663 = vshrl.u32 %v662, 7
        %v664 = vsub.s32 1, %v663
        %v665 = vrot.slane %v544, %v664
        %v666 = vadd.f32 %v661, %v665
        %v667 = vsel %vm615, %v666, 0.0
        %668 = vadd.xlane.f32.xlu0 %v667
        %v669 = vpop.xlane.xlu0 %668
        %vm670 = vcmp.eq.s32.totalorder %v638, 1
        %v671 = vsel %vm670, %v669, 0.0
        %v672 = vadd.f32 %v655, %v671
        %v673 = vld [vmem:[#allocation5] sm:$0x3]
        %v674 = vadd.f32 %v672, %v636
        %v675 = vadd.f32 %v673, %v674
        %vm676 = vcmask 9216
        %677 = vst.msk [vmem:[#allocation5] sm:$0x3] %vm676, %v675
        %p678 = scmp.eq.s32.totalorder %s33, 1
        // Predicated region
        $region61: #{tpu_custom_call.1} parent=55 // pred_check
          %p679 = pneg %p678
        $region62: #{tpu_custom_call.1} parent=55 // pred_check_branch
          %681 = sbr.rel (%p679) target = $region64
        $region63: #{tpu_custom_call.1} parent=55 // pred_region
          %s682 = sld [smem:[#allocation6]]
          %s683 = sld [smem:[#allocation7]]
          %v684 = vld [vmem:[#allocation5] sm:$0x3]
          %v685 = vstv %s682
          %v686 = vmul.f32 %v685, %v684
          %v687 = vstv %s683
          %v688 = vsub.f32 %v687, %v686
          %v689 = vlaneseq
          %v690 = vshrl.u32 %v689, 7
          %vm691 = vcmp.eq.s32.totalorder %v690, %v638
          %v692 = vsel %vm691, 1, 0
          %v693 = vcvt.s32.f32 %v692
          %v694 = vmax.f32 %v688, 0.0
          %v695 = vmul.f32 %v688, %v693
          %v696 = vsub.f32 %v694, %v695
          %v697 = vand.u32 2147483647, %v688
          %v698 = vsub.f32 0.0, %v697
          %v699 = vmul.f32 %v698, 1.442695
          %v700 = vpow.pop %v699
          %v701 = vadd.f32 %v700, 1.0
          %v702 = vlog2.pop %v701
          %v703 = vmul.f32 %v702, 0.6931472
          %v704 = vadd.f32 %v696, %v703
          %v705 = vsel %vm676, %v704, 0.0
          %706 = vadd.xlane.f32.xlu0 %v705
          %v707 = vpop.xlane.xlu0 %706
          %v708 = vrot.slane %v707, 4
          %v709 = vadd.f32 %v707, %v708
          %v710 = vrot.slane %v709, 2
          %v711 = vadd.f32 %v709, %v710
          %v712 = vrot.slane %v711, 1
          %v713 = vadd.f32 %v711, %v712
          %s714 = vtos %v713
          %v715 = vld [vmem:[#allocation2] sm:$0x3]
          %v716 = vmul.f32 %v715, -0.5
          %v717 = vld [vmem:[#allocation3] sm:$0x3]
          %v718 = vmul.f32 %v717, -0.5
          %v719 = vld [vmem:[#allocation4] sm:$0x3]
          %v720 = vmul.f32 %v719, -0.5
          %722 = vset.pattern.permute.xlu0 0
          %723 = vperm.xlu0 %722, %v716
          %v724 = vpop.permute.xlu0 %723
          %v726 = vsel %vm653, %v724, 0.0
          %728 = vset.pattern.permute.xlu0 0
          %729 = vperm.xlu0 %728, %v718
          %v730 = vpop.permute.xlu0 %729
          %v732 = vsel %vm670, %v730, 0.0
          %v733 = vadd.f32 %v726, %v732
          %vm734 = vcmp.eq.s32.totalorder %v638, 2
          %736 = vset.pattern.permute.xlu0 0
          %737 = vperm.xlu0 %736, %v720
          %v738 = vpop.permute.xlu0 %737
          %v740 = vsel %vm734, %v738, 0.0
          %v741 = vadd.f32 %v733, %v740
          %vm742 = vcmp.eq.s32.totalorder %v638, 3
          %v743 = vstv %s714
          %v744 = vsel %vm742, %v743, 0.0
          %v745 = vadd.f32 %v741, %v744
          %746 = vst [vmem:[#allocation13] sm:$0x3] %v745
        $region64: #{tpu_custom_call.1} parent=55 // pred_fallthru
          _
        %s747 = sand.u32 %s265, 1
        %s748 = scalar_lea.sflag [#allocation9], %s747
        %s749 = sand.u32 %s265, 1
        %s750 = smul.addr %s749, 2
        %s751 = scalar_lea.vmem [#allocation8], %s750
        %s752 = sand.u32 %s33, 1
        %s753 = scalar_lea.sflag [#allocation11], %s752
        %s754 = sand.u32 %s291, 1
        %s755 = smul.addr %s754, 2
        %s756 = scalar_lea.vmem [#allocation10], %s755
        %s757 = sand.u32 %s33, 1
        %s758 = scalar_lea.sflag [#allocation11], %s757
        %s759 = sand.u32 %s317, 1
        %s760 = smul.addr %s759, 2
        %s761 = scalar_lea.vmem [#allocation12], %s760
        // Predicated region
        $region65: #{tpu_custom_call.1} parent=55 // pred_check
          %p762 = pneg %p275
        $region66: #{tpu_custom_call.1} parent=55 // pred_check_branch
          %764 = sbr.rel (%p762) target = $region68
        $region67: #{tpu_custom_call.1} parent=55 // pred_region
          %s766 = ssub.s32 32, 32
          %767 = vsyncadd %s748, %s766
          %s768 = smul.addr %s33, 32
          %s769 = scalar_lea.hbm %s9, %s768
          %s771 = sshll.u32 %s751, 4
          %s772 = int_to_ptr.vmem [resolvable:$true] %s771
          %774 = dma.vmem_to_hbm [thread:$0]  %s772, 32, %s769, %s748
        $region68: #{tpu_custom_call.1} parent=55 // pred_fallthru
          _
        // Predicated region
        $region69: #{tpu_custom_call.1} parent=55 // pred_check
          %p775 = pneg %p301
        $region70: #{tpu_custom_call.1} parent=55 // pred_check_branch
          %777 = sbr.rel (%p775) target = $region72
        $region71: #{tpu_custom_call.1} parent=55 // pred_region
          %s779 = ssub.s32 32, 32
          %780 = vsyncadd %s753, %s779
          %s781 = smul.addr %s33, 32
          %s782 = scalar_lea.hbm %s10, %s781
          %s784 = sshll.u32 %s756, 4
          %s785 = int_to_ptr.vmem [resolvable:$true] %s784
          %787 = dma.vmem_to_hbm [thread:$0]  %s785, 32, %s782, %s753
        $region72: #{tpu_custom_call.1} parent=55 // pred_fallthru
          _
        // Predicated region
        $region73: #{tpu_custom_call.1} parent=55 // pred_check
          %p788 = pneg %p327
        $region74: #{tpu_custom_call.1} parent=55 // pred_check_branch
          %790 = sbr.rel (%p788) target = $region76
        $region75: #{tpu_custom_call.1} parent=55 // pred_region
          %s792 = ssub.s32 32, 32
          %793 = vsyncadd %s758, %s792
          %s794 = smul.addr %s33, 32
          %s795 = scalar_lea.hbm %s11, %s794
          %s797 = sshll.u32 %s761, 4
          %s798 = int_to_ptr.vmem [resolvable:$true] %s797
          %800 = dma.vmem_to_hbm [thread:$0]  %s798, 32, %s795, %s758
        $region76: #{tpu_custom_call.1} parent=55 // pred_fallthru
          _
        // Predicated region
        $region77: #{tpu_custom_call.1} parent=55 // pred_check
          %p801 = pneg %p348
        $region78: #{tpu_custom_call.1} parent=55 // pred_check_branch
          %803 = sbr.rel (%p801) target = $region80
        $region79: #{tpu_custom_call.1} parent=55 // pred_region
          %s805 = ssub.s32 32, 32
          %806 = vsyncadd [#allocation14], %s805
          %s808 = sshll.u32 [#allocation13], 4
          %s809 = int_to_ptr.vmem [resolvable:$true] %s808
          %811 = dma.vmem_to_hbm [thread:$0]  %s809, 32, %s12, [#allocation14]
        $region80: #{tpu_custom_call.1} parent=55 // pred_fallthru
          _
        // Predicated region
        $region81: #{tpu_custom_call.1} parent=55 // pred_check
          %p812 = pneg %p348
        $region82: #{tpu_custom_call.1} parent=55 // pred_check_branch
          %814 = sbr.rel (%p812) target = $region84
        $region83: #{tpu_custom_call.1} parent=55 // pred_region
          %815 = dma.done [#allocation14], 32
        $region84: #{tpu_custom_call.1} parent=55 // pred_fallthru
          _
      $region56: #{tpu_custom_call.1} parent=5 // pred_fallthru
        _
      %p816 = scmp.le.s32.totalorder 2, %s28
      // Predicated region
      $region85: #{tpu_custom_call.1} parent=5 // pred_check
        %p817 = pneg %p816
      $region86: #{tpu_custom_call.1} parent=5 // pred_check_branch
        %819 = sbr.rel (%p817) target = $region88
      $region87: #{tpu_custom_call.1} parent=5 // pred_region
        %s820 = ssub.s32 %s28, 2
        // Predicated region
        $region89: #{tpu_custom_call.1} parent=87 // pred_check
          %p821 = pneg %p281
        $region90: #{tpu_custom_call.1} parent=87 // pred_check_branch
          %823 = sbr.rel (%p821) target = $region92
        $region91: #{tpu_custom_call.1} parent=87 // pred_region
          %s824 = sand.u32 %s266, 1
          %s825 = scalar_lea.sflag [#allocation9], %s824
          %s826 = sand.u32 %s266, 1
          %s827 = smul.addr %s826, 2
          %s828 = scalar_lea.vmem [#allocation8], %s827
          %829 = dma.done %s825, 32
        $region92: #{tpu_custom_call.1} parent=87 // pred_fallthru
          _
        // Predicated region
        $region93: #{tpu_custom_call.1} parent=87 // pred_check
          %p830 = pneg %p307
        $region94: #{tpu_custom_call.1} parent=87 // pred_check_branch
          %832 = sbr.rel (%p830) target = $region96
        $region95: #{tpu_custom_call.1} parent=87 // pred_region
          %s833 = sand.u32 %s34, 1
          %s834 = scalar_lea.sflag [#allocation11], %s833
          %s835 = sand.u32 %s292, 1
          %s836 = smul.addr %s835, 2
          %s837 = scalar_lea.vmem [#allocation10], %s836
          %838 = dma.done %s834, 32
        $region96: #{tpu_custom_call.1} parent=87 // pred_fallthru
          _
        // Predicated region
        $region97: #{tpu_custom_call.1} parent=87 // pred_check
          %p839 = pneg %p333
        $region98: #{tpu_custom_call.1} parent=87 // pred_check_branch
          %841 = sbr.rel (%p839) target = $region100
        $region99: #{tpu_custom_call.1} parent=87 // pred_region
          %s842 = sand.u32 %s34, 1
          %s843 = scalar_lea.sflag [#allocation11], %s842
          %s844 = sand.u32 %s318, 1
          %s845 = smul.addr %s844, 2
          %s846 = scalar_lea.vmem [#allocation12], %s845
          %847 = dma.done %s843, 32
        $region100: #{tpu_custom_call.1} parent=87 // pred_fallthru
          _
      $region88: #{tpu_custom_call.1} parent=5 // pred_fallthru
        _
    $region6: #{tpu_custom_call.1} parent=1 // loop_footer
      %s32 = sadd.s32 1, %s28
    $region7: #{tpu_custom_call.1} parent=1 // loop_footer_branch
      %27 = sbr.rel target = $region3
    $region8: #{tpu_custom_call.1} parent=1 // loop_exit
      _
    %848 = vsyncpa [#allocation9], 1
    %s849 = scalar_lea.sflag [#allocation9], 1
    %850 = vsyncpa %s849, 1
    %851 = vsyncpa [#allocation11], 1
    %s852 = scalar_lea.sflag [#allocation11], 1
    %853 = vsyncpa %s852, 1
    %854 = vsyncpa [#allocation14], 1

</llo_original>
